<compile_context>
chip_gen: v6e
topology: v6e:2x2x1
jax: 0.10.0
libtpu: 0.0.40
codegen_flags: <defaults>
</compile_context>

<pallas_src>
import jax
import jax.numpy as jnp
from jax import lax
from jax.experimental import pallas as pl
from jax.experimental.pallas import tpu as pltpu


# ---------------------------------------------------------------------------
# Parameter-derived tensors (compute ONCE per parameter set and reuse).
# ---------------------------------------------------------------------------
def build_derived_params(params, num_agents, compute_dtype=jnp.bfloat16):
    """Fused/expanded weights; depends only on parameters, not the batch."""
    A = num_agents
    if A < 2:
        # The CTDE wrapper's "other agents' messages" is empty for A == 1.
        raise ValueError("build_derived_params requires num_agents >= 2")

    f32 = jnp.float32
    w_obs = params["w_obs"].astype(f32)                 # (obs, H)
    w_msg = params["w_msg"].astype(f32)                 # ((A-1)*msg, H)
    obs_dim, hidden = w_obs.shape
    msg = w_msg.shape[0] // (A - 1)
    wa, wm = params["wa"].astype(f32), params["wm"].astype(f32)
    act = wa.shape[1]

    eye_a = jnp.eye(A, dtype=f32)

    # Block-diagonal obs weights (A*obs, A*H): agent i's obs feed only agent
    # i's hidden columns with the shared w_obs.
    w_obs_bd = jnp.einsum("ij,kh->ikjh", eye_a, w_obs).reshape(
        A * obs_dim, A * hidden)

    # Expanded message weights (A*msg, A*H): column block i applies the shared
    # message weights to every OTHER agent j's messages (rows for j == i are
    # zero).  Folds the per-agent gather into the matmul.
    w_msg_3d = w_msg.reshape(A - 1, msg, hidden)
    i_idx = jnp.arange(A)[:, None]                      # target agent
    j_idx = jnp.arange(A)[None, :]                      # source agent
    pos = jnp.clip(j_idx - (j_idx > i_idx).astype(jnp.int32), 0, A - 2)
    gathered = w_msg_3d[pos]                            # (A_tgt, A_src, msg, H)
    valid = (j_idx != i_idx)[:, :, None, None]
    w_msg_exp = jnp.where(valid, gathered, jnp.zeros_like(gathered))
    w_msg_exp = jnp.transpose(w_msg_exp, (1, 2, 0, 3)).reshape(
        A * msg, A * hidden)

    # Single fused first-layer weight: rows = [obs block | message block].
    w1 = jnp.concatenate([w_obs_bd, w_msg_exp], axis=0).astype(compute_dtype)

    # Fused head, block-diagonal over agents, columns reordered to
    # [all A*act | all A*msg] and zero-padded to a multiple of 128 lanes.
    wa_bd = jnp.einsum("ij,kh->ikjh", eye_a, wa).reshape(A * hidden, A * act)
    wm_bd = jnp.einsum("ij,kh->ikjh", eye_a, wm).reshape(A * hidden, A * msg)
    n_act, n_msg = A * act, A * msg
    n_out = n_act + n_msg
    n_out_pad = ((n_out + 127) // 128) * 128
    w_head = jnp.concatenate([wa_bd, wm_bd], axis=1)
    w_head = jnp.pad(w_head, ((0, 0), (0, n_out_pad - n_out)))
    w_head = w_head.astype(compute_dtype)

    # Biases stay f32 (added after f32 accumulation).
    b1_wide = jnp.tile(params["b1"].reshape(1, hidden).astype(f32), (1, A))
    b_head_wide = jnp.concatenate(
        [jnp.tile(params["ba"].reshape(1, act).astype(f32), (1, A)),
         jnp.tile(params["bm"].reshape(1, msg).astype(f32), (1, A)),
         jnp.zeros((1, n_out_pad - n_out), f32)], axis=1)

    return {
        "w1": w1,                    # (A*(obs+msg), A*H)   compute dtype
        "w_head": w_head,            # (A*H, n_out_pad)     compute dtype
        "b1": b1_wide,               # (1, A*H)             f32
        "b_head": b_head_wide,       # (1, n_out_pad)       f32
        "dims": (A, obs_dim, hidden, msg, act, n_out_pad),
    }


def _pick_tile_b(batch):
    """Batch tile: small batches take one tile; large batches get >=2 programs
    (v7x second TensorCore) with bounded VMEM; ragged B is padded."""
    if batch <= 128:
        return batch
    for cand in (2048, 1024, 512, 256, 128):
        if batch >= 2 * cand:
            return cand
    return 128


# ---------------------------------------------------------------------------
# Forward wrapper: free reshapes + one concat, one pallas_call.
# ---------------------------------------------------------------------------
def ctde_forward(observations, messages, derived):
    """observations: (B, A, obs_dim); messages: (B, A, msg) or None."""
    A, obs_dim, hidden, msg, act, n_out_pad = derived["dims"]
    B = observations.shape[0]
    assert observations.shape[1] == A and observations.shape[2] == obs_dim
    n_act, n_msg = A * act, A * msg
    n_hid = A * hidden

    if messages is None:
        # Zero messages contribute zero; kept identical to the module.
        messages = jnp.zeros((B, A, msg), dtype=observations.dtype)

    # Fused first-layer input [obs agent-major | msg agent-major]; adjacent-dim
    # merges only (no transposes).  Ideally built this way upstream.
    x_wide = jnp.concatenate(
        [observations.reshape(B, A * obs_dim), messages.reshape(B, A * msg)],
        axis=-1)
    n_in = x_wide.shape[1]

    w1 = derived["w1"]
    w_head = derived["w_head"]
    b1 = derived["b1"]
    b_head = derived["b_head"]

    # Batch tiling with ragged-B padding (never fall back to tile_b = B for
    # large non-divisible B).
    tile_b = _pick_tile_b(B)
    num_tiles = -(-B // tile_b)
    b_pad = num_tiles * tile_b
    if b_pad != B:
        x_wide = jnp.pad(x_wide, ((0, b_pad - B), (0, 0)))

    def kernel(x_ref, w1_ref, b1_ref, wh_ref, bh_ref, out_ref):
        # Cast activations to the weight (compute) dtype in-kernel — hides
        # under the matmul, avoids a per-call XLA astype pass in the wrapper.
        x = x_ref[...].astype(w1_ref.dtype)
        h = jnp.dot(x, w1_ref[...], preferred_element_type=jnp.float32)
        h = jnp.tanh(h + b1_ref[...])
        y = jnp.dot(h.astype(wh_ref.dtype), wh_ref[...],
                    preferred_element_type=jnp.float32) + bh_ref[...]
        # tanh only on the next-message columns [n_act, n_act+n_msg).
        # Built from an in-kernel iota (no mask DMA / VMEM buffer); output is
        # a single lane-dense (tile_b, n_out_pad) store.
        col = lax.broadcasted_iota(jnp.int32, y.shape, 1)
        is_msg_col = (col >= n_act) & (col < n_act + n_msg)
        out_ref[...] = jnp.where(is_msg_col, jnp.tanh(y), y).astype(
            out_ref.dtype)

    # Cost / VMEM bookkeeping.
    flops = 2 * b_pad * n_in * n_hid + 2 * b_pad * n_hid * n_out_pad
    transcendentals = b_pad * n_hid + b_pad * n_out_pad
    bytes_accessed = (
        x_wide.size * x_wide.dtype.itemsize
        + w1.size * w1.dtype.itemsize + w_head.size * w_head.dtype.itemsize
        + (b1.size + b_head.size) * 4 + b_pad * n_out_pad * 4)
    weight_bytes = (w1.size * w1.dtype.itemsize
                    + w_head.size * w_head.dtype.itemsize
                    + (b1.size + b_head.size) * 4)
    io_bytes = 2 * tile_b * (n_in * x_wide.dtype.itemsize + n_out_pad * 4)
    vmem_limit = int(min(max(2 * (weight_bytes + io_bytes) + (8 << 20),
                             32 << 20), 127 << 20))
    # TODO(synk): for very large A the block-diagonal weights scale as A^2*H;
    # add a second grid axis tiling the A*H / n_out_pad weight columns (or a
    # shared-weight (B*A, H) layout) so the kernel still fits v7x's 64 MiB.

    def run(single_buffer_weights):
        if single_buffer_weights:
            # Constant-index blocks never change across the batch grid: single
            # buffer them (halves their VMEM footprint vs default double buf).
            def const(shape):
                return pl.BlockSpec(shape, lambda *_: (0,) * len(shape),
                                    pipeline_mode=pl.Buffered(1))
        else:
            def const(shape):
                return pl.BlockSpec(shape, lambda *_: (0,) * len(shape))

        return pl.pallas_call(
            kernel,
            out_shape=jax.ShapeDtypeStruct((b_pad, n_out_pad), jnp.float32),
            grid=(num_tiles,),
            in_specs=[
                pl.BlockSpec((tile_b, n_in), lambda i: (i, 0)),   # x
                const((n_in, n_hid)),                             # W1 fused
                const((1, n_hid)),                                # b1
                const((n_hid, n_out_pad)),                        # W head
                const((1, n_out_pad)),                            # b head
            ],
            out_specs=pl.BlockSpec((tile_b, n_out_pad), lambda i: (i, 0)),
            compiler_params=pltpu.CompilerParams(
                dimension_semantics=("parallel",),
                vmem_limit_bytes=vmem_limit),
            cost_estimate=pl.CostEstimate(
                flops=flops, transcendentals=transcendentals,
                bytes_accessed=bytes_accessed),
        )(x_wide, w1, b1, w_head, b_head)

    try:
        out_wide = run(single_buffer_weights=True)
    except Exception:
        # Fallback for jax versions that reject Buffered(1); identical math.
        out_wide = run(single_buffer_weights=False)

    out_wide = out_wide[:B]
    actions = out_wide[:, :n_act].reshape(B, A, act)
    next_messages = out_wide[:, n_act:n_act + n_msg].reshape(B, A, msg)
    return actions, next_messages


# ---------------------------------------------------------------------------
# Pure-JAX reference (mirrors the PyTorch per-agent loop exactly).
# ---------------------------------------------------------------------------
def ctde_reference(observations, messages, params):
    B, A, _ = observations.shape
    msg = params["w_msg"].shape[0] // (A - 1)
    if messages is None:
        messages = jnp.zeros((B, A, msg), dtype=observations.dtype)
    w1 = jnp.concatenate([params["w_obs"], params["w_msg"]], axis=0)
    acts, nmsgs = [], []
    for i in range(A):
        obs = observations[:, i, :]
        other = jnp.concatenate(
            [messages[:, j, :] for j in range(A) if j != i], axis=-1)
        x = jnp.concatenate([obs, other], axis=-1)
        h = jnp.tanh(x @ w1 + params["b1"])
        acts.append(h @ params["wa"] + params["ba"])
        nmsgs.append(jnp.tanh(h @ params["wm"] + params["bm"]))
    actions = jnp.concatenate(acts, -1).reshape(B, A, -1)
    next_messages = jnp.concatenate(nmsgs, -1).reshape(B, A, -1)
    return actions, next_messages


if __name__ == "__main__":
    # Small shapes consistent with the module's forward.
    B, A, OBS, MSG, HID, ACT = 8, 4, 16, 8, 32, 4

    key = jax.random.PRNGKey(0)
    ks = jax.random.split(key, 8)
    observations = jax.random.normal(ks[0], (B, A, OBS), dtype=jnp.float32)
    messages = jax.random.normal(ks[1], (B, A, MSG), dtype=jnp.float32)

    # Deterministic synthetic parameters for the (assumed) agent_model.
    params = {
        "w_obs": 0.1 * jax.random.normal(ks[2], (OBS, HID), dtype=jnp.float32),
        "w_msg": 0.1 * jax.random.normal(ks[3], ((A - 1) * MSG, HID),
                                         dtype=jnp.float32),
        "b1": 0.01 * jax.random.normal(ks[4], (1, HID), dtype=jnp.float32),
        "wa": 0.1 * jax.random.normal(ks[5], (HID, ACT), dtype=jnp.float32),
        "ba": jnp.zeros((1, ACT), dtype=jnp.float32),
        "wm": 0.1 * jax.random.normal(ks[6], (HID, MSG), dtype=jnp.float32),
        "bm": jnp.zeros((1, MSG), dtype=jnp.float32),
    }

    ref_act, ref_msg = ctde_reference(observations, messages, params)

    # f32 compute path: strict check against the per-agent reference.
    derived_f32 = build_derived_params(params, A, compute_dtype=jnp.float32)
    actions, next_messages = ctde_forward(observations, messages, derived_f32)
    jax.block_until_ready((actions, next_messages))
    assert actions.shape == (B, A, ACT) and next_messages.shape == (B, A, MSG)
    assert jnp.allclose(actions, ref_act, atol=1e-5, rtol=1e-5)
    assert jnp.allclose(next_messages, ref_msg, atol=1e-5, rtol=1e-5)

    # messages=None default path.
    a0, m0 = ctde_forward(observations, None, derived_f32)
    jax.block_until_ready((a0, m0))
    r_a0, r_m0 = ctde_reference(observations, None, params)
    assert jnp.allclose(a0, r_a0, atol=1e-5, rtol=1e-5)
    assert jnp.allclose(m0, r_m0, atol=1e-5, rtol=1e-5)

    # Default bf16 weights (full-rate MXU, f32 accumulation) — loose tolerance
    # against the f32 reference.
    derived_bf16 = build_derived_params(params, A)
    a16, m16 = ctde_forward(observations, messages, derived_bf16)
    jax.block_until_ready((a16, m16))
    assert jnp.allclose(a16, ref_act, atol=1e-1, rtol=1e-1)
    assert jnp.allclose(m16, ref_msg, atol=1e-1, rtol=1e-1)

    print("KERNEL_OK")
</pallas_src>

<mosaic_0001>
module attributes {stable_mosaic.version = 11 : i64} {
  func.func @kernel(%arg0: i32, %arg1: memref<8x96xf32, #tpu.memory_space<vmem>>, %arg2: memref<96x128xf32, #tpu.memory_space<vmem>>, %arg3: memref<1x128xf32, #tpu.memory_space<vmem>>, %arg4: memref<128x128xf32, #tpu.memory_space<vmem>>, %arg5: memref<1x128xf32, #tpu.memory_space<vmem>>, %arg6: memref<8x128xf32, #tpu.memory_space<vmem>>) attributes {dimension_semantics = [#tpu.dimension_semantics<parallel>], iteration_bounds = array<i64: 1>, scalar_prefetch = 0 : i64, scratch_operands = 0 : i64, tpu.core_type = #tpu.core_type<tc>, window_params = [{transform_indices = @transform_0, window_bounds = array<i64: 8, 96>}, {pipeline_mode = #tpu.pipeline_mode<synchronous>, transform_indices = @transform_1, window_bounds = array<i64: 96, 128>}, {pipeline_mode = #tpu.pipeline_mode<synchronous>, transform_indices = @transform_2, window_bounds = array<i64: 1, 128>}, {pipeline_mode = #tpu.pipeline_mode<synchronous>, transform_indices = @transform_3, window_bounds = array<i64: 128, 128>}, {pipeline_mode = #tpu.pipeline_mode<synchronous>, transform_indices = @transform_4, window_bounds = array<i64: 1, 128>}, {transform_indices = @transform_5, window_bounds = array<i64: 8, 128>}]} {
    %c0 = arith.constant 0 : index
    %c0_0 = arith.constant 0 : index
    %0 = vector.load %arg1[%c0, %c0_0] : memref<8x96xf32, #tpu.memory_space<vmem>>, vector<8x96xf32>
    %c0_1 = arith.constant 0 : index
    %c0_2 = arith.constant 0 : index
    %1 = vector.load %arg2[%c0_1, %c0_2] : memref<96x128xf32, #tpu.memory_space<vmem>>, vector<96x128xf32>
    %cst = arith.constant dense<0.000000e+00> : vector<8x128xf32>
    %2 = tpu.matmul %0, %1, %cst {dimension_numbers = #tpu.dot_dimension_numbers<[1], [0], [0], [1], [0, 0, 1, 1], [], []>} : vector<8x96xf32>, vector<96x128xf32>, vector<8x128xf32> -> vector<8x128xf32>
    %c0_3 = arith.constant 0 : index
    %c0_4 = arith.constant 0 : index
    %3 = vector.load %arg3[%c0_3, %c0_4] : memref<1x128xf32, #tpu.memory_space<vmem>>, vector<1x128xf32>
    %4 = vector.broadcast %3 : vector<1x128xf32> to vector<8x128xf32>
    %5 = arith.addf %2, %4 : vector<8x128xf32>
    %6 = math.tanh %5 : vector<8x128xf32>
    %c0_5 = arith.constant 0 : index
    %c0_6 = arith.constant 0 : index
    %7 = vector.load %arg4[%c0_5, %c0_6] : memref<128x128xf32, #tpu.memory_space<vmem>>, vector<128x128xf32>
    %cst_7 = arith.constant dense<0.000000e+00> : vector<8x128xf32>
    %8 = tpu.matmul %6, %7, %cst_7 {dimension_numbers = #tpu.dot_dimension_numbers<[1], [0], [0], [1], [0, 0, 1, 1], [], []>} : vector<8x128xf32>, vector<128x128xf32>, vector<8x128xf32> -> vector<8x128xf32>
    %c0_8 = arith.constant 0 : index
    %c0_9 = arith.constant 0 : index
    %9 = vector.load %arg5[%c0_8, %c0_9] : memref<1x128xf32, #tpu.memory_space<vmem>>, vector<1x128xf32>
    %10 = vector.broadcast %9 : vector<1x128xf32> to vector<8x128xf32>
    %11 = arith.addf %8, %10 : vector<8x128xf32>
    %12 = tpu.iota {dimensions = array<i32: 1>} : vector<8x128xi32>
    %c16_i32 = arith.constant 16 : i32
    %13 = vector.broadcast %c16_i32 : i32 to vector<8x128xi32>
    %14 = arith.cmpi sge, %12, %13 : vector<8x128xi32>
    %c48_i32 = arith.constant 48 : i32
    %15 = vector.broadcast %c48_i32 : i32 to vector<8x128xi32>
    %16 = arith.cmpi slt, %12, %15 : vector<8x128xi32>
    %17 = arith.andi %14, %16 : vector<8x128xi1>
    %18 = math.tanh %11 : vector<8x128xf32>
    %19 = arith.select %17, %18, %11 : vector<8x128xi1>, vector<8x128xf32>
    %c0_10 = arith.constant 0 : index
    %c0_11 = arith.constant 0 : index
    %20 = vector.load %arg6[%c0_10, %c0_11] : memref<8x128xf32, #tpu.memory_space<vmem>>, vector<8x128xf32>
    tpu.vector_store %arg6[%c0_10, %c0_11], %19 {strides = array<i32>} : memref<8x128xf32, #tpu.memory_space<vmem>>, vector<8x128xf32>,
    return
  }
  func.func @transform_0(%arg0: i32) -> (i32, i32) {
    %c0_i32 = arith.constant 0 : i32
    %c0_i32_0 = arith.constant 0 : i32
    return %arg0, %c0_i32 : i32, i32
  }
  func.func @transform_1(%arg0: i32) -> (i32, i32) {
    %c0_i32 = arith.constant 0 : i32
    %c0_i32_0 = arith.constant 0 : i32
    %c0_i32_1 = arith.constant 0 : i32
    return %c0_i32, %c0_i32_0 : i32, i32
  }
  func.func @transform_2(%arg0: i32) -> (i32, i32) {
    %c0_i32 = arith.constant 0 : i32
    %c0_i32_0 = arith.constant 0 : i32
    %c0_i32_1 = arith.constant 0 : i32
    return %c0_i32, %c0_i32_0 : i32, i32
  }
  func.func @transform_3(%arg0: i32) -> (i32, i32) {
    %c0_i32 = arith.constant 0 : i32
    %c0_i32_0 = arith.constant 0 : i32
    %c0_i32_1 = arith.constant 0 : i32
    return %c0_i32, %c0_i32_0 : i32, i32
  }
  func.func @transform_4(%arg0: i32) -> (i32, i32) {
    %c0_i32 = arith.constant 0 : i32
    %c0_i32_0 = arith.constant 0 : i32
    %c0_i32_1 = arith.constant 0 : i32
    return %c0_i32, %c0_i32_0 : i32, i32
  }
  func.func @transform_5(%arg0: i32) -> (i32, i32) {
    %c0_i32 = arith.constant 0 : i32
    %c0_i32_0 = arith.constant 0 : i32
    return %arg0, %c0_i32 : i32, i32
  }
}

module attributes {stable_mosaic.version = 11 : i64} {
  func.func @kernel(%arg0: i32, %arg1: memref<8x96xf32, #tpu.memory_space<vmem>>, %arg2: memref<96x128xf32, #tpu.memory_space<vmem>>, %arg3: memref<1x128xf32, #tpu.memory_space<vmem>>, %arg4: memref<128x128xf32, #tpu.memory_space<vmem>>, %arg5: memref<1x128xf32, #tpu.memory_space<vmem>>, %arg6: memref<8x128xf32, #tpu.memory_space<vmem>>) attributes {dimension_semantics = [#tpu.dimension_semantics<parallel>], iteration_bounds = array<i64: 1>, scalar_prefetch = 0 : i64, scratch_operands = 0 : i64, tpu.core_type = #tpu.core_type<tc>, window_params = [{transform_indices = @transform_0, window_bounds = array<i64: 8, 96>}, {pipeline_mode = #tpu.pipeline_mode<synchronous>, transform_indices = @transform_1, window_bounds = array<i64: 96, 128>}, {pipeline_mode = #tpu.pipeline_mode<synchronous>, transform_indices = @transform_2, window_bounds = array<i64: 1, 128>}, {pipeline_mode = #tpu.pipeline_mode<synchronous>, transform_indices = @transform_3, window_bounds = array<i64: 128, 128>}, {pipeline_mode = #tpu.pipeline_mode<synchronous>, transform_indices = @transform_4, window_bounds = array<i64: 1, 128>}, {transform_indices = @transform_5, window_bounds = array<i64: 8, 128>}]} {
    %c0 = arith.constant 0 : index
    %c0_0 = arith.constant 0 : index
    %0 = vector.load %arg1[%c0, %c0_0] : memref<8x96xf32, #tpu.memory_space<vmem>>, vector<8x96xf32>
    %c0_1 = arith.constant 0 : index
    %c0_2 = arith.constant 0 : index
    %1 = vector.load %arg2[%c0_1, %c0_2] : memref<96x128xf32, #tpu.memory_space<vmem>>, vector<96x128xf32>
    %cst = arith.constant dense<0.000000e+00> : vector<8x128xf32>
    %2 = tpu.matmul %0, %1, %cst {dimension_numbers = #tpu.dot_dimension_numbers<[1], [0], [0], [1], [0, 0, 1, 1], [], []>} : vector<8x96xf32>, vector<96x128xf32>, vector<8x128xf32> -> vector<8x128xf32>
    %c0_3 = arith.constant 0 : index
    %c0_4 = arith.constant 0 : index
    %3 = vector.load %arg3[%c0_3, %c0_4] : memref<1x128xf32, #tpu.memory_space<vmem>>, vector<1x128xf32>
    %4 = vector.broadcast %3 : vector<1x128xf32> to vector<8x128xf32>
    %5 = arith.addf %2, %4 : vector<8x128xf32>
    %6 = math.tanh %5 : vector<8x128xf32>
    %c0_5 = arith.constant 0 : index
    %c0_6 = arith.constant 0 : index
    %7 = vector.load %arg4[%c0_5, %c0_6] : memref<128x128xf32, #tpu.memory_space<vmem>>, vector<128x128xf32>
    %cst_7 = arith.constant dense<0.000000e+00> : vector<8x128xf32>
    %8 = tpu.matmul %6, %7, %cst_7 {dimension_numbers = #tpu.dot_dimension_numbers<[1], [0], [0], [1], [0, 0, 1, 1], [], []>} : vector<8x128xf32>, vector<128x128xf32>, vector<8x128xf32> -> vector<8x128xf32>
    %c0_8 = arith.constant 0 : index
    %c0_9 = arith.constant 0 : index
    %9 = vector.load %arg5[%c0_8, %c0_9] : memref<1x128xf32, #tpu.memory_space<vmem>>, vector<1x128xf32>
    %10 = vector.broadcast %9 : vector<1x128xf32> to vector<8x128xf32>
    %11 = arith.addf %8, %10 : vector<8x128xf32>
    %12 = tpu.iota {dimensions = array<i32: 1>} : vector<8x128xi32>
    %c16_i32 = arith.constant 16 : i32
    %13 = vector.broadcast %c16_i32 : i32 to vector<8x128xi32>
    %14 = arith.cmpi sge, %12, %13 : vector<8x128xi32>
    %c48_i32 = arith.constant 48 : i32
    %15 = vector.broadcast %c48_i32 : i32 to vector<8x128xi32>
    %16 = arith.cmpi slt, %12, %15 : vector<8x128xi32>
    %17 = arith.andi %14, %16 : vector<8x128xi1>
    %18 = math.tanh %11 : vector<8x128xf32>
    %19 = arith.select %17, %18, %11 : vector<8x128xi1>, vector<8x128xf32>
    %c0_10 = arith.constant 0 : index
    %c0_11 = arith.constant 0 : index
    %20 = vector.load %arg6[%c0_10, %c0_11] : memref<8x128xf32, #tpu.memory_space<vmem>>, vector<8x128xf32>
    tpu.vector_store %arg6[%c0_10, %c0_11], %19 {strides = array<i32>} : memref<8x128xf32, #tpu.memory_space<vmem>>, vector<8x128xf32>,
    return
  }
  func.func @transform_0(%arg0: i32) -> (i32, i32) {
    %c0_i32 = arith.constant 0 : i32
    %c0_i32_0 = arith.constant 0 : i32
    return %arg0, %c0_i32 : i32, i32
  }
  func.func @transform_1(%arg0: i32) -> (i32, i32) {
    %c0_i32 = arith.constant 0 : i32
    %c0_i32_0 = arith.constant 0 : i32
    %c0_i32_1 = arith.constant 0 : i32
    return %c0_i32, %c0_i32_0 : i32, i32
  }
  func.func @transform_2(%arg0: i32) -> (i32, i32) {
    %c0_i32 = arith.constant 0 : i32
    %c0_i32_0 = arith.constant 0 : i32
    %c0_i32_1 = arith.constant 0 : i32
    return %c0_i32, %c0_i32_0 : i32, i32
  }
  func.func @transform_3(%arg0: i32) -> (i32, i32) {
    %c0_i32 = arith.constant 0 : i32
    %c0_i32_0 = arith.constant 0 : i32
    %c0_i32_1 = arith.constant 0 : i32
    return %c0_i32, %c0_i32_0 : i32, i32
  }
  func.func @transform_4(%arg0: i32) -> (i32, i32) {
    %c0_i32 = arith.constant 0 : i32
    %c0_i32_0 = arith.constant 0 : i32
    %c0_i32_1 = arith.constant 0 : i32
    return %c0_i32, %c0_i32_0 : i32, i32
  }
  func.func @transform_5(%arg0: i32) -> (i32, i32) {
    %c0_i32 = arith.constant 0 : i32
    %c0_i32_0 = arith.constant 0 : i32
    return %arg0, %c0_i32 : i32, i32
  }
}

</mosaic_0001>

<llo_original>
// kernel: tpu_custom_call.1
$region0: #{tpu_custom_call.1}
  #allocation0 [shape = 'u32[]', space=smem, size = 0x4, offset = 0x4, fixed_abs, tag = 'smem constant byte address 0x4 - core index']
  #allocation1 [shape = 'u32[144,128]{1,0:T(1,128)}', space=vmem, size = 0x12000, scoped, tag = 'internal scratch']
  %s0 = inlined_call_operand.hbm [shape: f32[8,96], index: 0, kind: input, shape index: {}]
  %s1 = inlined_call_operand.hbm [shape: f32[96,128], index: 1, kind: input, shape index: {}]
  %s2 = inlined_call_operand.vmem [shape: f32[1,128], index: 2, kind: input, shape index: {}]
  %s3 = inlined_call_operand.hbm [shape: f32[128,128], index: 3, kind: input, shape index: {}]
  %s4 = inlined_call_operand.vmem [shape: f32[1,128], index: 4, kind: input, shape index: {}]
  %s5 = inlined_call_operand.hbm [shape: f32[8,128], index: 5, kind: output, shape index: {}]
  %s6 = sld [smem:[#allocation0]]
  $region42: #{tpu_custom_call.1} parent=0
    _
  %s8 = ssub.s32 1, %s6
  %s9 = scalar_select 0, %s8, %s6
  $region1: #{tpu_custom_call.1} parent=0
    #allocation2 [shape = 'u8[4096]{0}', space=vmem, size = 0x1000, scoped, tag = 'input window, operand 0, single buffered']
    #allocation3 [shape = 's32[1]{0}', space=sflag, size = 0x4, scoped, tag = 'scoped memory for tpu_custom_call.1']
    #allocation4 [shape = 's32[1]{0}', space=sflag, size = 0x4, scoped, tag = 'scoped memory for tpu_custom_call.1']
    #allocation5 [shape = 'u8[49152]{0}', space=vmem, size = 0xc000, scoped, tag = 'input window, operand 1, single buffered']
    #allocation6 [shape = 's32[1]{0}', space=sflag, size = 0x4, scoped, tag = 'scoped memory for tpu_custom_call.1']
    #allocation7 [shape = 'u8[65536]{0}', space=vmem, size = 0x10000, scoped, tag = 'input window, operand 3, single buffered']
    #allocation8 [shape = 'u8[4096]{0}', space=vmem, size = 0x1000, scoped, tag = 'output window, operand 0, single buffered']
    %10 = vsyncpa [#allocation3], 0
    %11 = vsyncpa [#allocation6], 0
    %12 = vsyncpa [#allocation4], 0
    // Predicated region
    $region2: #{tpu_custom_call.1} parent=1 // pred_check
      _
    $region3: #{tpu_custom_call.1} parent=1 // pred_check_branch
      %14 = sbr.rel (0) target = $region5
    $region4: #{tpu_custom_call.1} parent=1 // pred_region
      %s16 = ssub.s32 128, 128
      %17 = vsyncadd [#allocation3], %s16
      %s19 = sshll.u32 [#allocation2], 4
      %s20 = int_to_ptr.vmem [resolvable:$true] %s19
      %22 = dma.hbm_to_vmem [thread:$0]  %s0, 128, %s20, [#allocation3]
    $region5: #{tpu_custom_call.1} parent=1 // pred_fallthru
      _
    // Predicated region
    $region6: #{tpu_custom_call.1} parent=1 // pred_check
      _
    $region7: #{tpu_custom_call.1} parent=1 // pred_check_branch
      %24 = sbr.rel (0) target = $region9
    $region8: #{tpu_custom_call.1} parent=1 // pred_region
      %s26 = ssub.s32 1536, 1536
      %27 = vsyncadd [#allocation6], %s26
      %s28 = sshll.u32 [#allocation5], 4
      %s29 = int_to_ptr.vmem [resolvable:$true] %s28
      %34 = dma.hbm_to_vmem [thread:$0]  %s1, 1536, %s29, [#allocation6], 128, 128, 8
    $region9: #{tpu_custom_call.1} parent=1 // pred_fallthru
      _
    // Predicated region
    $region10: #{tpu_custom_call.1} parent=1 // pred_check
      _
    $region11: #{tpu_custom_call.1} parent=1 // pred_check_branch
      %36 = sbr.rel (0) target = $region13
    $region12: #{tpu_custom_call.1} parent=1 // pred_region
      _
    $region13: #{tpu_custom_call.1} parent=1 // pred_fallthru
      _
    // Predicated region
    $region14: #{tpu_custom_call.1} parent=1 // pred_check
      _
    $region15: #{tpu_custom_call.1} parent=1 // pred_check_branch
      %38 = sbr.rel (0) target = $region17
    $region16: #{tpu_custom_call.1} parent=1 // pred_region
      %s40 = ssub.s32 2048, 2048
      %41 = vsyncadd [#allocation6], %s40
      %s42 = sshll.u32 [#allocation7], 4
      %s43 = int_to_ptr.vmem [resolvable:$true] %s42
      %48 = dma.hbm_to_vmem [thread:$0]  %s3, 2048, %s43, [#allocation6], 128, 128, 8
    $region17: #{tpu_custom_call.1} parent=1 // pred_fallthru
      _
    // Predicated region
    $region18: #{tpu_custom_call.1} parent=1 // pred_check
      _
    $region19: #{tpu_custom_call.1} parent=1 // pred_check_branch
      %50 = sbr.rel (0) target = $region21
    $region20: #{tpu_custom_call.1} parent=1 // pred_region
      _
    $region21: #{tpu_custom_call.1} parent=1 // pred_fallthru
      _
    // Predicated region
    $region22: #{tpu_custom_call.1} parent=1 // pred_check
      _
    $region23: #{tpu_custom_call.1} parent=1 // pred_check_branch
      %52 = sbr.rel (0) target = $region25
    $region24: #{tpu_custom_call.1} parent=1 // pred_region
      %53 = dma.done [#allocation3], 128
    $region25: #{tpu_custom_call.1} parent=1 // pred_fallthru
      _
    // Predicated region
    $region26: #{tpu_custom_call.1} parent=1 // pred_check
      _
    $region27: #{tpu_custom_call.1} parent=1 // pred_check_branch
      %55 = sbr.rel (0) target = $region29
    $region28: #{tpu_custom_call.1} parent=1 // pred_region
      %56 = dma.done [#allocation6], 1536
    $region29: #{tpu_custom_call.1} parent=1 // pred_fallthru
      _
    // Predicated region
    $region30: #{tpu_custom_call.1} parent=1 // pred_check
      _
    $region31: #{tpu_custom_call.1} parent=1 // pred_check_branch
      %58 = sbr.rel (0) target = $region33
    $region32: #{tpu_custom_call.1} parent=1 // pred_region
      %59 = dma.done [#allocation6], 2048
    $region33: #{tpu_custom_call.1} parent=1 // pred_fallthru
      _
    %v60 = vld [vmem:[#allocation2] sm:$0xff]
    %v61 = vld [vmem:[#allocation5] sm:$0xff]
    %v62 = vld [vmem:[#allocation5 + $0x8] sm:$0xff]
    %v63 = vld [vmem:[#allocation5 + $0x10] sm:$0xff]
    %v64 = vld [vmem:[#allocation5 + $0x18] sm:$0xff]
    %v65 = vld [vmem:[#allocation5 + $0x20] sm:$0xff]
    %v66 = vld [vmem:[#allocation5 + $0x28] sm:$0xff]
    %v67 = vld [vmem:[#allocation5 + $0x30] sm:$0xff]
    %v68 = vld [vmem:[#allocation5 + $0x38] sm:$0xff]
    %v69 = vld [vmem:[#allocation5 + $0x40] sm:$0xff]
    %v70 = vld [vmem:[#allocation5 + $0x48] sm:$0xff]
    %v71 = vld [vmem:[#allocation5 + $0x50] sm:$0xff]
    %v72 = vld [vmem:[#allocation5 + $0x58] sm:$0xff]
    %v73 = vld [vmem:[%s2] sm:$0x1]
    %v75 = vlaneseq
    %v76 = vshrl.u32 %v75, 7
    %v77 = vsub.s32 0, %v76
    %v78 = vrot.slane %v73, %v77
    %vm80 = vcmask 785408
    %v82 = vsel %vm80, %v60, 0
    %84 = vmatprep.subr.mxu0 0.0
    %85 = vmatpush1.msra.mxu0 0.0
    %86 = vmatprep.subr.mxu0 0.0
    %87 = vmatpush1.msra.mxu0 0.0
    %88 = vmatprep.subr.mxu0 0.0
    %89 = vmatpush1.msra.mxu0 0.0
    %90 = vmatprep.subr.mxu0 0.0
    %91 = vmatpush1.msra.mxu0 0.0
    %92 = vmatprep.subr.mxu0 0.0
    %93 = vmatpush1.msra.mxu0 %v72
    %94 = vmatprep.subr.mxu0 0.0
    %95 = vmatpush1.msra.mxu0 %v71
    %96 = vmatprep.subr.mxu0 0.0
    %97 = vmatpush1.msra.mxu0 %v70
    %98 = vmatprep.subr.mxu0 0.0
    %99 = vmatpush1.msra.mxu0 %v69
    %100 = vmatprep.subr.mxu0 0.0
    %101 = vmatpush1.msra.mxu0 %v68
    %102 = vmatprep.subr.mxu0 0.0
    %103 = vmatpush1.msra.mxu0 %v67
    %104 = vmatprep.subr.mxu0 0.0
    %105 = vmatpush1.msra.mxu0 %v66
    %106 = vmatprep.subr.mxu0 0.0
    %107 = vmatpush1.msra.mxu0 %v65
    %108 = vmatprep.subr.mxu0 0.0
    %109 = vmatpush1.msra.mxu0 %v64
    %110 = vmatprep.subr.mxu0 0.0
    %111 = vmatpush1.msra.mxu0 %v63
    %112 = vmatprep.subr.mxu0 0.0
    %113 = vmatpush1.msra.mxu0 %v62
    %114 = vmatprep.subr.mxu0 0.0
    %115 = vmatpush1.msra.mxu0 %v61
    %116 = vmatprep.subr.mxu0 0.0
    %117 = vmatpush2.msra.mxu0 0.0
    %118 = vmatprep.subr.mxu0 0.0
    %119 = vmatpush2.msra.mxu0 0.0
    %120 = vmatprep.subr.mxu0 0.0
    %121 = vmatpush2.msra.mxu0 0.0
    %122 = vmatprep.subr.mxu0 0.0
    %123 = vmatpush2.msra.mxu0 0.0
    %124 = vmatprep.subr.mxu0 0.0
    %125 = vmatpush2.msra.mxu0 0.0
    %126 = vmatprep.subr.mxu0 0.0
    %127 = vmatpush2.msra.mxu0 0.0
    %128 = vmatprep.subr.mxu0 0.0
    %129 = vmatpush2.msra.mxu0 0.0
    %130 = vmatprep.subr.mxu0 0.0
    %131 = vmatpush2.msra.mxu0 0.0
    %132 = vmatprep.subr.mxu0 0.0
    %133 = vmatpush2.msra.mxu0 0.0
    %134 = vmatprep.subr.mxu0 0.0
    %135 = vmatpush2.msra.mxu0 0.0
    %136 = vmatprep.subr.mxu0 0.0
    %137 = vmatpush2.msra.mxu0 0.0
    %138 = vmatprep.subr.mxu0 0.0
    %139 = vmatpush2.msra.mxu0 0.0
    %140 = vmatprep.subr.mxu0 0.0
    %141 = vmatpush2.msra.mxu0 0.0
    %142 = vmatprep.subr.mxu0 0.0
    %143 = vmatpush2.msra.mxu0 0.0
    %144 = vmatprep.subr.mxu0 0.0
    %145 = vmatpush2.msra.mxu0 0.0
    %146 = vmatprep.subr.mxu0 0.0
    %147 = vmatpush2.msra.mxu0 0.0
    %148 = vmatprep.mubr.f32.mxu0 0.0
    %149 = vmatmul.mubr.f32.gmra.mxu0 %v82
    %v150 = vpop.f32.mrf.mxu0
    %v151 = vadd.f32 %v78, %v150
    %v152 = vpop.f32.mrf.mxu0
    %153 = vdwg.mxu0
    %v154 = vtanh.pop %v151
    %v155 = vld [vmem:[#allocation7] sm:$0xff]
    %v156 = vld [vmem:[#allocation7 + $0x8] sm:$0xff]
    %v157 = vld [vmem:[#allocation7 + $0x10] sm:$0xff]
    %v158 = vld [vmem:[#allocation7 + $0x18] sm:$0xff]
    %v159 = vld [vmem:[#allocation7 + $0x20] sm:$0xff]
    %v160 = vld [vmem:[#allocation7 + $0x28] sm:$0xff]
    %v161 = vld [vmem:[#allocation7 + $0x30] sm:$0xff]
    %v162 = vld [vmem:[#allocation7 + $0x38] sm:$0xff]
    %v163 = vld [vmem:[#allocation7 + $0x40] sm:$0xff]
    %v164 = vld [vmem:[#allocation7 + $0x48] sm:$0xff]
    %v165 = vld [vmem:[#allocation7 + $0x50] sm:$0xff]
    %v166 = vld [vmem:[#allocation7 + $0x58] sm:$0xff]
    %v167 = vld [vmem:[#allocation7 + $0x60] sm:$0xff]
    %v168 = vld [vmem:[#allocation7 + $0x68] sm:$0xff]
    %v169 = vld [vmem:[#allocation7 + $0x70] sm:$0xff]
    %v170 = vld [vmem:[#allocation7 + $0x78] sm:$0xff]
    %v171 = vld [vmem:[%s4] sm:$0x1]
    %v173 = vlaneseq
    %v174 = vshrl.u32 %v173, 7
    %v175 = vsub.s32 0, %v174
    %v176 = vrot.slane %v171, %v175
    %178 = vmatprep.subr.mxu0 0.0
    %179 = vmatpush1.msra.mxu0 %v170
    %180 = vmatprep.subr.mxu0 0.0
    %181 = vmatpush1.msra.mxu0 %v169
    %182 = vmatprep.subr.mxu0 0.0
    %183 = vmatpush1.msra.mxu0 %v168
    %184 = vmatprep.subr.mxu0 0.0
    %185 = vmatpush1.msra.mxu0 %v167
    %186 = vmatprep.subr.mxu0 0.0
    %187 = vmatpush1.msra.mxu0 %v166
    %188 = vmatprep.subr.mxu0 0.0
    %189 = vmatpush1.msra.mxu0 %v165
    %190 = vmatprep.subr.mxu0 0.0
    %191 = vmatpush1.msra.mxu0 %v164
    %192 = vmatprep.subr.mxu0 0.0
    %193 = vmatpush1.msra.mxu0 %v163
    %194 = vmatprep.subr.mxu0 0.0
    %195 = vmatpush1.msra.mxu0 %v162
    %196 = vmatprep.subr.mxu0 0.0
    %197 = vmatpush1.msra.mxu0 %v161
    %198 = vmatprep.subr.mxu0 0.0
    %199 = vmatpush1.msra.mxu0 %v160
    %200 = vmatprep.subr.mxu0 0.0
    %201 = vmatpush1.msra.mxu0 %v159
    %202 = vmatprep.subr.mxu0 0.0
    %203 = vmatpush1.msra.mxu0 %v158
    %204 = vmatprep.subr.mxu0 0.0
    %205 = vmatpush1.msra.mxu0 %v157
    %206 = vmatprep.subr.mxu0 0.0
    %207 = vmatpush1.msra.mxu0 %v156
    %208 = vmatprep.subr.mxu0 0.0
    %209 = vmatpush1.msra.mxu0 %v155
    %210 = vmatprep.subr.mxu0 0.0
    %211 = vmatpush2.msra.mxu0 0.0
    %212 = vmatprep.subr.mxu0 0.0
    %213 = vmatpush2.msra.mxu0 0.0
    %214 = vmatprep.subr.mxu0 0.0
    %215 = vmatpush2.msra.mxu0 0.0
    %216 = vmatprep.subr.mxu0 0.0
    %217 = vmatpush2.msra.mxu0 0.0
    %218 = vmatprep.subr.mxu0 0.0
    %219 = vmatpush2.msra.mxu0 0.0
    %220 = vmatprep.subr.mxu0 0.0
    %221 = vmatpush2.msra.mxu0 0.0
    %222 = vmatprep.subr.mxu0 0.0
    %223 = vmatpush2.msra.mxu0 0.0
    %224 = vmatprep.subr.mxu0 0.0
    %225 = vmatpush2.msra.mxu0 0.0
    %226 = vmatprep.subr.mxu0 0.0
    %227 = vmatpush2.msra.mxu0 0.0
    %228 = vmatprep.subr.mxu0 0.0
    %229 = vmatpush2.msra.mxu0 0.0
    %230 = vmatprep.subr.mxu0 0.0
    %231 = vmatpush2.msra.mxu0 0.0
    %232 = vmatprep.subr.mxu0 0.0
    %233 = vmatpush2.msra.mxu0 0.0
    %234 = vmatprep.subr.mxu0 0.0
    %235 = vmatpush2.msra.mxu0 0.0
    %236 = vmatprep.subr.mxu0 0.0
    %237 = vmatpush2.msra.mxu0 0.0
    %238 = vmatprep.subr.mxu0 0.0
    %239 = vmatpush2.msra.mxu0 0.0
    %240 = vmatprep.subr.mxu0 0.0
    %241 = vmatpush2.msra.mxu0 0.0
    %242 = vmatprep.mubr.f32.mxu0 0.0
    %243 = vmatmul.mubr.f32.gmra.mxu0 %v154
    %v244 = vpop.f32.mrf.mxu0
    %v245 = vadd.f32 %v176, %v244
    %v246 = vpop.f32.mrf.mxu0
    %247 = vdwg.mxu0
    %v248 = vlaneseq
    %v249 = vand.u32 %v248, 127
    %vm250 = vcmp.ge.s32.totalorder %v249, 16
    %vm251 = vcmp.lt.s32.totalorder %v249, 48
    %vm252 = vmand %vm250, %vm251
    %v253 = vtanh.pop %v245
    %v254 = vsel %vm252, %v253, %v245
    %255 = vst [vmem:[#allocation8] sm:$0xff] %v254
    // Predicated region
    $region34: #{tpu_custom_call.1} parent=1 // pred_check
      _
    $region35: #{tpu_custom_call.1} parent=1 // pred_check_branch
      %257 = sbr.rel (0) target = $region37
    $region36: #{tpu_custom_call.1} parent=1 // pred_region
      %s259 = ssub.s32 128, 128
      %260 = vsyncadd [#allocation4], %s259
      %s262 = sshll.u32 [#allocation8], 4
      %s263 = int_to_ptr.vmem [resolvable:$true] %s262
      %265 = dma.vmem_to_hbm [thread:$0]  %s263, 128, %s5, [#allocation4]
    $region37: #{tpu_custom_call.1} parent=1 // pred_fallthru
      _
    // Predicated region
    $region38: #{tpu_custom_call.1} parent=1 // pred_check
      _
    $region39: #{tpu_custom_call.1} parent=1 // pred_check_branch
      %267 = sbr.rel (0) target = $region41
    $region40: #{tpu_custom_call.1} parent=1 // pred_region
      %268 = dma.done [#allocation4], 128
    $region41: #{tpu_custom_call.1} parent=1 // pred_fallthru
      _
    %269 = vsyncpa [#allocation3], 1
    %270 = vsyncpa [#allocation6], 1
    %271 = vsyncpa [#allocation4], 1

// kernel: tpu_custom_call.1
$region0: #{tpu_custom_call.1}
  #allocation0 [shape = 'u32[]', space=smem, size = 0x4, offset = 0x4, fixed_abs, tag = 'smem constant byte address 0x4 - core index']
  #allocation1 [shape = 'u32[144,128]{1,0:T(1,128)}', space=vmem, size = 0x12000, scoped, tag = 'internal scratch']
  %s0 = inlined_call_operand.hbm [shape: f32[8,96], index: 0, kind: input, shape index: {}]
  %s1 = inlined_call_operand.hbm [shape: f32[96,128], index: 1, kind: input, shape index: {}]
  %s2 = inlined_call_operand.vmem [shape: f32[1,128], index: 2, kind: input, shape index: {}]
  %s3 = inlined_call_operand.hbm [shape: f32[128,128], index: 3, kind: input, shape index: {}]
  %s4 = inlined_call_operand.vmem [shape: f32[1,128], index: 4, kind: input, shape index: {}]
  %s5 = inlined_call_operand.hbm [shape: f32[8,128], index: 5, kind: output, shape index: {}]
  %s6 = sld [smem:[#allocation0]]
  $region42: #{tpu_custom_call.1} parent=0
    _
  %s8 = ssub.s32 1, %s6
  %s9 = scalar_select 0, %s8, %s6
  $region1: #{tpu_custom_call.1} parent=0
    #allocation2 [shape = 'u8[4096]{0}', space=vmem, size = 0x1000, scoped, tag = 'input window, operand 0, single buffered']
    #allocation3 [shape = 's32[1]{0}', space=sflag, size = 0x4, scoped, tag = 'scoped memory for tpu_custom_call.1']
    #allocation4 [shape = 's32[1]{0}', space=sflag, size = 0x4, scoped, tag = 'scoped memory for tpu_custom_call.1']
    #allocation5 [shape = 'u8[49152]{0}', space=vmem, size = 0xc000, scoped, tag = 'input window, operand 1, single buffered']
    #allocation6 [shape = 's32[1]{0}', space=sflag, size = 0x4, scoped, tag = 'scoped memory for tpu_custom_call.1']
    #allocation7 [shape = 'u8[65536]{0}', space=vmem, size = 0x10000, scoped, tag = 'input window, operand 3, single buffered']
    #allocation8 [shape = 'u8[4096]{0}', space=vmem, size = 0x1000, scoped, tag = 'output window, operand 0, single buffered']
    %10 = vsyncpa [#allocation3], 0
    %11 = vsyncpa [#allocation6], 0
    %12 = vsyncpa [#allocation4], 0
    // Predicated region
    $region2: #{tpu_custom_call.1} parent=1 // pred_check
      _
    $region3: #{tpu_custom_call.1} parent=1 // pred_check_branch
      %14 = sbr.rel (0) target = $region5
    $region4: #{tpu_custom_call.1} parent=1 // pred_region
      %s16 = ssub.s32 128, 128
      %17 = vsyncadd [#allocation3], %s16
      %s19 = sshll.u32 [#allocation2], 4
      %s20 = int_to_ptr.vmem [resolvable:$true] %s19
      %22 = dma.hbm_to_vmem [thread:$0]  %s0, 128, %s20, [#allocation3]
    $region5: #{tpu_custom_call.1} parent=1 // pred_fallthru
      _
    // Predicated region
    $region6: #{tpu_custom_call.1} parent=1 // pred_check
      _
    $region7: #{tpu_custom_call.1} parent=1 // pred_check_branch
      %24 = sbr.rel (0) target = $region9
    $region8: #{tpu_custom_call.1} parent=1 // pred_region
      %s26 = ssub.s32 1536, 1536
      %27 = vsyncadd [#allocation6], %s26
      %s28 = sshll.u32 [#allocation5], 4
      %s29 = int_to_ptr.vmem [resolvable:$true] %s28
      %34 = dma.hbm_to_vmem [thread:$0]  %s1, 1536, %s29, [#allocation6], 128, 128, 8
    $region9: #{tpu_custom_call.1} parent=1 // pred_fallthru
      _
    // Predicated region
    $region10: #{tpu_custom_call.1} parent=1 // pred_check
      _
    $region11: #{tpu_custom_call.1} parent=1 // pred_check_branch
      %36 = sbr.rel (0) target = $region13
    $region12: #{tpu_custom_call.1} parent=1 // pred_region
      _
    $region13: #{tpu_custom_call.1} parent=1 // pred_fallthru
      _
    // Predicated region
    $region14: #{tpu_custom_call.1} parent=1 // pred_check
      _
    $region15: #{tpu_custom_call.1} parent=1 // pred_check_branch
      %38 = sbr.rel (0) target = $region17
    $region16: #{tpu_custom_call.1} parent=1 // pred_region
      %s40 = ssub.s32 2048, 2048
      %41 = vsyncadd [#allocation6], %s40
      %s42 = sshll.u32 [#allocation7], 4
      %s43 = int_to_ptr.vmem [resolvable:$true] %s42
      %48 = dma.hbm_to_vmem [thread:$0]  %s3, 2048, %s43, [#allocation6], 128, 128, 8
    $region17: #{tpu_custom_call.1} parent=1 // pred_fallthru
      _
    // Predicated region
    $region18: #{tpu_custom_call.1} parent=1 // pred_check
      _
    $region19: #{tpu_custom_call.1} parent=1 // pred_check_branch
      %50 = sbr.rel (0) target = $region21
    $region20: #{tpu_custom_call.1} parent=1 // pred_region
      _
    $region21: #{tpu_custom_call.1} parent=1 // pred_fallthru
      _
    // Predicated region
    $region22: #{tpu_custom_call.1} parent=1 // pred_check
      _
    $region23: #{tpu_custom_call.1} parent=1 // pred_check_branch
      %52 = sbr.rel (0) target = $region25
    $region24: #{tpu_custom_call.1} parent=1 // pred_region
      %53 = dma.done [#allocation3], 128
    $region25: #{tpu_custom_call.1} parent=1 // pred_fallthru
      _
    // Predicated region
    $region26: #{tpu_custom_call.1} parent=1 // pred_check
      _
    $region27: #{tpu_custom_call.1} parent=1 // pred_check_branch
      %55 = sbr.rel (0) target = $region29
    $region28: #{tpu_custom_call.1} parent=1 // pred_region
      %56 = dma.done [#allocation6], 1536
    $region29: #{tpu_custom_call.1} parent=1 // pred_fallthru
      _
    // Predicated region
    $region30: #{tpu_custom_call.1} parent=1 // pred_check
      _
    $region31: #{tpu_custom_call.1} parent=1 // pred_check_branch
      %58 = sbr.rel (0) target = $region33
    $region32: #{tpu_custom_call.1} parent=1 // pred_region
      %59 = dma.done [#allocation6], 2048
    $region33: #{tpu_custom_call.1} parent=1 // pred_fallthru
      _
    %v60 = vld [vmem:[#allocation2] sm:$0xff]
    %v61 = vld [vmem:[#allocation5] sm:$0xff]
    %v62 = vld [vmem:[#allocation5 + $0x8] sm:$0xff]
    %v63 = vld [vmem:[#allocation5 + $0x10] sm:$0xff]
    %v64 = vld [vmem:[#allocation5 + $0x18] sm:$0xff]
    %v65 = vld [vmem:[#allocation5 + $0x20] sm:$0xff]
    %v66 = vld [vmem:[#allocation5 + $0x28] sm:$0xff]
    %v67 = vld [vmem:[#allocation5 + $0x30] sm:$0xff]
    %v68 = vld [vmem:[#allocation5 + $0x38] sm:$0xff]
    %v69 = vld [vmem:[#allocation5 + $0x40] sm:$0xff]
    %v70 = vld [vmem:[#allocation5 + $0x48] sm:$0xff]
    %v71 = vld [vmem:[#allocation5 + $0x50] sm:$0xff]
    %v72 = vld [vmem:[#allocation5 + $0x58] sm:$0xff]
    %v73 = vld [vmem:[%s2] sm:$0x1]
    %v75 = vlaneseq
    %v76 = vshrl.u32 %v75, 7
    %v77 = vsub.s32 0, %v76
    %v78 = vrot.slane %v73, %v77
    %vm80 = vcmask 785408
    %v82 = vsel %vm80, %v60, 0
    %84 = vmatprep.subr.mxu0 0.0
    %85 = vmatpush1.msra.mxu0 0.0
    %86 = vmatprep.subr.mxu0 0.0
    %87 = vmatpush1.msra.mxu0 0.0
    %88 = vmatprep.subr.mxu0 0.0
    %89 = vmatpush1.msra.mxu0 0.0
    %90 = vmatprep.subr.mxu0 0.0
    %91 = vmatpush1.msra.mxu0 0.0
    %92 = vmatprep.subr.mxu0 0.0
    %93 = vmatpush1.msra.mxu0 %v72
    %94 = vmatprep.subr.mxu0 0.0
    %95 = vmatpush1.msra.mxu0 %v71
    %96 = vmatprep.subr.mxu0 0.0
    %97 = vmatpush1.msra.mxu0 %v70
    %98 = vmatprep.subr.mxu0 0.0
    %99 = vmatpush1.msra.mxu0 %v69
    %100 = vmatprep.subr.mxu0 0.0
    %101 = vmatpush1.msra.mxu0 %v68
    %102 = vmatprep.subr.mxu0 0.0
    %103 = vmatpush1.msra.mxu0 %v67
    %104 = vmatprep.subr.mxu0 0.0
    %105 = vmatpush1.msra.mxu0 %v66
    %106 = vmatprep.subr.mxu0 0.0
    %107 = vmatpush1.msra.mxu0 %v65
    %108 = vmatprep.subr.mxu0 0.0
    %109 = vmatpush1.msra.mxu0 %v64
    %110 = vmatprep.subr.mxu0 0.0
    %111 = vmatpush1.msra.mxu0 %v63
    %112 = vmatprep.subr.mxu0 0.0
    %113 = vmatpush1.msra.mxu0 %v62
    %114 = vmatprep.subr.mxu0 0.0
    %115 = vmatpush1.msra.mxu0 %v61
    %116 = vmatprep.subr.mxu0 0.0
    %117 = vmatpush2.msra.mxu0 0.0
    %118 = vmatprep.subr.mxu0 0.0
    %119 = vmatpush2.msra.mxu0 0.0
    %120 = vmatprep.subr.mxu0 0.0
    %121 = vmatpush2.msra.mxu0 0.0
    %122 = vmatprep.subr.mxu0 0.0
    %123 = vmatpush2.msra.mxu0 0.0
    %124 = vmatprep.subr.mxu0 0.0
    %125 = vmatpush2.msra.mxu0 0.0
    %126 = vmatprep.subr.mxu0 0.0
    %127 = vmatpush2.msra.mxu0 0.0
    %128 = vmatprep.subr.mxu0 0.0
    %129 = vmatpush2.msra.mxu0 0.0
    %130 = vmatprep.subr.mxu0 0.0
    %131 = vmatpush2.msra.mxu0 0.0
    %132 = vmatprep.subr.mxu0 0.0
    %133 = vmatpush2.msra.mxu0 0.0
    %134 = vmatprep.subr.mxu0 0.0
    %135 = vmatpush2.msra.mxu0 0.0
    %136 = vmatprep.subr.mxu0 0.0
    %137 = vmatpush2.msra.mxu0 0.0
    %138 = vmatprep.subr.mxu0 0.0
    %139 = vmatpush2.msra.mxu0 0.0
    %140 = vmatprep.subr.mxu0 0.0
    %141 = vmatpush2.msra.mxu0 0.0
    %142 = vmatprep.subr.mxu0 0.0
    %143 = vmatpush2.msra.mxu0 0.0
    %144 = vmatprep.subr.mxu0 0.0
    %145 = vmatpush2.msra.mxu0 0.0
    %146 = vmatprep.subr.mxu0 0.0
    %147 = vmatpush2.msra.mxu0 0.0
    %148 = vmatprep.mubr.f32.mxu0 0.0
    %149 = vmatmul.mubr.f32.gmra.mxu0 %v82
    %v150 = vpop.f32.mrf.mxu0
    %v151 = vadd.f32 %v78, %v150
    %v152 = vpop.f32.mrf.mxu0
    %153 = vdwg.mxu0
    %v154 = vtanh.pop %v151
    %v155 = vld [vmem:[#allocation7] sm:$0xff]
    %v156 = vld [vmem:[#allocation7 + $0x8] sm:$0xff]
    %v157 = vld [vmem:[#allocation7 + $0x10] sm:$0xff]
    %v158 = vld [vmem:[#allocation7 + $0x18] sm:$0xff]
    %v159 = vld [vmem:[#allocation7 + $0x20] sm:$0xff]
    %v160 = vld [vmem:[#allocation7 + $0x28] sm:$0xff]
    %v161 = vld [vmem:[#allocation7 + $0x30] sm:$0xff]
    %v162 = vld [vmem:[#allocation7 + $0x38] sm:$0xff]
    %v163 = vld [vmem:[#allocation7 + $0x40] sm:$0xff]
    %v164 = vld [vmem:[#allocation7 + $0x48] sm:$0xff]
    %v165 = vld [vmem:[#allocation7 + $0x50] sm:$0xff]
    %v166 = vld [vmem:[#allocation7 + $0x58] sm:$0xff]
    %v167 = vld [vmem:[#allocation7 + $0x60] sm:$0xff]
    %v168 = vld [vmem:[#allocation7 + $0x68] sm:$0xff]
    %v169 = vld [vmem:[#allocation7 + $0x70] sm:$0xff]
    %v170 = vld [vmem:[#allocation7 + $0x78] sm:$0xff]
    %v171 = vld [vmem:[%s4] sm:$0x1]
    %v173 = vlaneseq
    %v174 = vshrl.u32 %v173, 7
    %v175 = vsub.s32 0, %v174
    %v176 = vrot.slane %v171, %v175
    %178 = vmatprep.subr.mxu0 0.0
    %179 = vmatpush1.msra.mxu0 %v170
    %180 = vmatprep.subr.mxu0 0.0
    %181 = vmatpush1.msra.mxu0 %v169
    %182 = vmatprep.subr.mxu0 0.0
    %183 = vmatpush1.msra.mxu0 %v168
    %184 = vmatprep.subr.mxu0 0.0
    %185 = vmatpush1.msra.mxu0 %v167
    %186 = vmatprep.subr.mxu0 0.0
    %187 = vmatpush1.msra.mxu0 %v166
    %188 = vmatprep.subr.mxu0 0.0
    %189 = vmatpush1.msra.mxu0 %v165
    %190 = vmatprep.subr.mxu0 0.0
    %191 = vmatpush1.msra.mxu0 %v164
    %192 = vmatprep.subr.mxu0 0.0
    %193 = vmatpush1.msra.mxu0 %v163
    %194 = vmatprep.subr.mxu0 0.0
    %195 = vmatpush1.msra.mxu0 %v162
    %196 = vmatprep.subr.mxu0 0.0
    %197 = vmatpush1.msra.mxu0 %v161
    %198 = vmatprep.subr.mxu0 0.0
    %199 = vmatpush1.msra.mxu0 %v160
    %200 = vmatprep.subr.mxu0 0.0
    %201 = vmatpush1.msra.mxu0 %v159
    %202 = vmatprep.subr.mxu0 0.0
    %203 = vmatpush1.msra.mxu0 %v158
    %204 = vmatprep.subr.mxu0 0.0
    %205 = vmatpush1.msra.mxu0 %v157
    %206 = vmatprep.subr.mxu0 0.0
    %207 = vmatpush1.msra.mxu0 %v156
    %208 = vmatprep.subr.mxu0 0.0
    %209 = vmatpush1.msra.mxu0 %v155
    %210 = vmatprep.subr.mxu0 0.0
    %211 = vmatpush2.msra.mxu0 0.0
    %212 = vmatprep.subr.mxu0 0.0
    %213 = vmatpush2.msra.mxu0 0.0
    %214 = vmatprep.subr.mxu0 0.0
    %215 = vmatpush2.msra.mxu0 0.0
    %216 = vmatprep.subr.mxu0 0.0
    %217 = vmatpush2.msra.mxu0 0.0
    %218 = vmatprep.subr.mxu0 0.0
    %219 = vmatpush2.msra.mxu0 0.0
    %220 = vmatprep.subr.mxu0 0.0
    %221 = vmatpush2.msra.mxu0 0.0
    %222 = vmatprep.subr.mxu0 0.0
    %223 = vmatpush2.msra.mxu0 0.0
    %224 = vmatprep.subr.mxu0 0.0
    %225 = vmatpush2.msra.mxu0 0.0
    %226 = vmatprep.subr.mxu0 0.0
    %227 = vmatpush2.msra.mxu0 0.0
    %228 = vmatprep.subr.mxu0 0.0
    %229 = vmatpush2.msra.mxu0 0.0
    %230 = vmatprep.subr.mxu0 0.0
    %231 = vmatpush2.msra.mxu0 0.0
    %232 = vmatprep.subr.mxu0 0.0
    %233 = vmatpush2.msra.mxu0 0.0
    %234 = vmatprep.subr.mxu0 0.0
    %235 = vmatpush2.msra.mxu0 0.0
    %236 = vmatprep.subr.mxu0 0.0
    %237 = vmatpush2.msra.mxu0 0.0
    %238 = vmatprep.subr.mxu0 0.0
    %239 = vmatpush2.msra.mxu0 0.0
    %240 = vmatprep.subr.mxu0 0.0
    %241 = vmatpush2.msra.mxu0 0.0
    %242 = vmatprep.mubr.f32.mxu0 0.0
    %243 = vmatmul.mubr.f32.gmra.mxu0 %v154
    %v244 = vpop.f32.mrf.mxu0
    %v245 = vadd.f32 %v176, %v244
    %v246 = vpop.f32.mrf.mxu0
    %247 = vdwg.mxu0
    %v248 = vlaneseq
    %v249 = vand.u32 %v248, 127
    %vm250 = vcmp.ge.s32.totalorder %v249, 16
    %vm251 = vcmp.lt.s32.totalorder %v249, 48
    %vm252 = vmand %vm250, %vm251
    %v253 = vtanh.pop %v245
    %v254 = vsel %vm252, %v253, %v245
    %255 = vst [vmem:[#allocation8] sm:$0xff] %v254
    // Predicated region
    $region34: #{tpu_custom_call.1} parent=1 // pred_check
      _
    $region35: #{tpu_custom_call.1} parent=1 // pred_check_branch
      %257 = sbr.rel (0) target = $region37
    $region36: #{tpu_custom_call.1} parent=1 // pred_region
      %s259 = ssub.s32 128, 128
      %260 = vsyncadd [#allocation4], %s259
      %s262 = sshll.u32 [#allocation8], 4
      %s263 = int_to_ptr.vmem [resolvable:$true] %s262
      %265 = dma.vmem_to_hbm [thread:$0]  %s263, 128, %s5, [#allocation4]
    $region37: #{tpu_custom_call.1} parent=1 // pred_fallthru
      _
    // Predicated region
    $region38: #{tpu_custom_call.1} parent=1 // pred_check
      _
    $region39: #{tpu_custom_call.1} parent=1 // pred_check_branch
      %267 = sbr.rel (0) target = $region41
    $region40: #{tpu_custom_call.1} parent=1 // pred_region
      %268 = dma.done [#allocation4], 128
    $region41: #{tpu_custom_call.1} parent=1 // pred_fallthru
      _
    %269 = vsyncpa [#allocation3], 1
    %270 = vsyncpa [#allocation6], 1
    %271 = vsyncpa [#allocation4], 1

</llo_original>
